<compile_context>
chip_gen: v5e
topology: v5e:2x2
jax: 0.10.0
libtpu: 0.0.40
codegen_flags: <defaults>
</compile_context>

<pallas_src>
import math
import functools

import jax
import jax.numpy as jnp
from jax.experimental import pallas as pl
from jax.experimental.pallas import tpu as pltpu

_MB = 1024 * 1024
_NEG_INF = -1e30


# --------------------------------------------------------------------------- #
# Hardware-aware knobs
# --------------------------------------------------------------------------- #
def _vmem_params():
    """Returns (tiling_budget_bytes, vmem_limit_bytes) per TPU generation."""
    kind = ""
    try:
        kind = jax.devices()[0].device_kind.lower()
    except Exception:
        pass
    if "v5 lite" in kind or "v5e" in kind or "v5lite" in kind:
        return 12 * _MB, 20 * _MB          # 128 MiB VMEM, 16 MiB scoped default
    if "v7" in kind or "tpu7" in kind:
        return 22 * _MB, 32 * _MB          # only 64 MiB physical VMEM per core
    if "v6" in kind or "trillium" in kind:
        return 26 * _MB, 48 * _MB          # 128 MiB VMEM, 32 MiB scoped default
    return 14 * _MB, 32 * _MB              # unknown generation: conservative


def _pick_tile(n, target, align=1):
    """Largest divisor of n that is <= target and a multiple of align; falls
    back to n itself (full extent is always a legal block)."""
    if n <= target:
        return n
    t = (min(target, n) // align) * align
    while t >= align:
        if n % t == 0:
            return t
        t -= align
    return n


def _pick_q_tile(n, target):
    """Query tile: prefer 256-, then 128-, then 8-aligned divisors (full MXU
    passes and lane-dense stores); fall back to full extent."""
    if n <= target:
        return n
    for align in (256, 128, 8):
        t = (min(target, n) // align) * align
        while t >= align:
            if n % t == 0:
                return t
            t -= align
    return n


def _pick_kv_tile(lk, target=512, max_tiles=64):
    """kv tile: a 128-aligned divisor of Lk, <= target when possible, with the
    number of kv tiles bounded (the final normalization loop is unrolled)."""
    divs = [d for d in range(128, lk + 1, 128) if lk % d == 0]
    if not divs:
        return lk
    small = [d for d in divs if d <= target]
    tk = max(small) if small else min(divs)
    if lk // tk > max_tiles:
        bounded = [d for d in divs if lk // d <= max_tiles]
        tk = min(bounded)
    return tk


def _choose_tiles_direct(th_base, lq, lk, dk, dv, itemsize, attn_itemsize, budget):
    th = _pick_tile(th_base, 8)
    tq = _pick_q_tile(lq, 512)

    def est(th_, tq_):
        blocks = th_ * (tq_ * dk + lk * dk + lk * dv + tq_ * dv) * itemsize
        attn_blk = th_ * tq_ * lk * attn_itemsize
        mask_blk = th_ * tq_ * lk * 4
        f32_tmp = 2 * th_ * tq_ * lk * 4
        return 2 * (blocks + attn_blk + mask_blk) + f32_tmp

    while th > 1 and est(th, tq) > budget:
        th = _pick_tile(th_base, max(th // 2, 1))
    while tq > 8 and est(th, tq) > budget:
        nt = _pick_q_tile(lq, max(tq // 2, 8))
        if nt >= tq:
            break
        tq = nt
    return th, tq, est(th, tq)


def _choose_tiles_flash(th_base, lq, lk, dk, dv, itemsize, attn_itemsize, budget):
    tk = _pick_kv_tile(lk)
    tq = _pick_q_tile(lq, 512)
    th = _pick_tile(th_base, 2)   # attn slab + K/V duplication scale with th

    def est(th_, tq_):
        io = th_ * (tq_ * dk + tk * dk + tk * dv + tq_ * dv) * itemsize
        mask_blk = th_ * tq_ * tk * 4
        attn_blk = th_ * tq_ * lk * attn_itemsize
        slab = th_ * tq_ * lk * 4                       # f32 raw-score scratch
        scr = th_ * tq_ * (2 + dv) * 4
        tmp = 3 * th_ * tq_ * tk * 4
        return 2 * (io + mask_blk + attn_blk) + slab + scr + tmp

    while th > 1 and est(th, tq) > budget:
        th = _pick_tile(th_base, max(th // 2, 1))
    while tq > 8 and est(th, tq) > budget:
        nt = _pick_q_tile(lq, max(tq // 2, 8))
        if nt >= tq:
            break
        tq = nt
    return th, tq, tk, est(th, tq)


# --------------------------------------------------------------------------- #
# Kernels
# --------------------------------------------------------------------------- #
def _attn_direct(q_ref, k_ref, v_ref, m_ref, o_ref, a_ref, *, scale, mxu_dtype):
    q = q_ref[...]                          # (TH, TQ, Dk)
    k = k_ref[...]                          # (TH, Lk, Dk)
    v = v_ref[...]                          # (TH, Lk, Dv)
    if mxu_dtype is not None:
        q = q.astype(mxu_dtype)
        k = k.astype(mxu_dtype)
        v = v.astype(mxu_dtype)

    s = jnp.einsum("bqd,bkd->bqk", q, k, preferred_element_type=jnp.float32)
    s = s * jnp.float32(scale)
    if m_ref is not None:
        # integer compare, no int->f32 cast in the hot loop
        s = jnp.where(m_ref[...] == 0, jnp.float32(_NEG_INF), s)

    s_max = jnp.max(s, axis=-1, keepdims=True)
    e = jnp.exp(s - s_max)
    denom = jnp.sum(e, axis=-1, keepdims=True)
    inv = pl.reciprocal(denom, approx=True)             # EUP slot (otherwise idle)
    inv = inv * (jnp.float32(2.0) - denom * inv)        # one Newton step
    attn = e * inv

    a_ref[...] = attn.astype(a_ref.dtype)
    o_ref[...] = jnp.einsum("bqk,bkd->bqd", attn.astype(v.dtype), v,
                            preferred_element_type=jnp.float32).astype(o_ref.dtype)


def _direct_mask(q, k, v, m, o, a, *, scale, mxu_dtype):
    _attn_direct(q, k, v, m, o, a, scale=scale, mxu_dtype=mxu_dtype)


def _direct_nomask(q, k, v, o, a, *, scale, mxu_dtype):
    _attn_direct(q, k, v, None, o, a, scale=scale, mxu_dtype=mxu_dtype)


def _attn_flash(q_ref, k_ref, v_ref, m_ref, o_ref, a_ref,
                s_slab, m_scr, l_scr, acc_scr, *, scale, n_kv, tk, mxu_dtype):
    """kv-tiled online-softmax attention.  Raw f32 scores per kv tile are
    staged in a VMEM scratch slab and normalized once at the last kv step, so
    the emitted attention weights are exact f32-softmax probabilities."""
    kv = pl.program_id(2)

    @pl.when(kv == 0)
    def _():
        m_scr[...] = jnp.full_like(m_scr, -jnp.inf)
        l_scr[...] = jnp.zeros_like(l_scr)
        acc_scr[...] = jnp.zeros_like(acc_scr)

    q = q_ref[...]                          # (TH, TQ, Dk)
    k = k_ref[...]                          # (TH, TK, Dk)
    v = v_ref[...]                          # (TH, TK, Dv)
    if mxu_dtype is not None:
        q = q.astype(mxu_dtype)
        k = k.astype(mxu_dtype)
        v = v.astype(mxu_dtype)

    s = jnp.einsum("bqd,bkd->bqk", q, k, preferred_element_type=jnp.float32)
    s = s * jnp.float32(scale)
    if m_ref is not None:
        s = jnp.where(m_ref[...] == 0, jnp.float32(_NEG_INF), s)

    s_slab[kv] = s                          # stash masked+scaled raw scores (f32)

    m_prev = m_scr[...]
    m_new = jnp.maximum(m_prev, jnp.max(s, axis=-1, keepdims=True))
    alpha = jnp.exp(m_prev - m_new)
    p = jnp.exp(s - m_new)
    l_new = alpha * l_scr[...] + jnp.sum(p, axis=-1, keepdims=True)
    acc_new = alpha * acc_scr[...] + jnp.einsum(
        "bqk,bkd->bqd", p.astype(v.dtype), v, preferred_element_type=jnp.float32)
    m_scr[...] = m_new
    l_scr[...] = l_new
    acc_scr[...] = acc_new

    @pl.when(kv == n_kv - 1)
    def _():
        inv = pl.reciprocal(l_new, approx=True)
        inv = inv * (jnp.float32(2.0) - l_new * inv)
        o_ref[...] = (acc_new * inv).astype(o_ref.dtype)
        # normalize the staged scores into the resident attn output block
        # (static, 128-aligned lane offsets -> unmasked lane-dense stores)
        for j in range(n_kv):
            a_ref[:, :, j * tk:(j + 1) * tk] = (
                jnp.exp(s_slab[j] - m_new) * inv).astype(a_ref.dtype)


def _flash_mask(q, k, v, m, o, a, slab, ms, ls, accs, *, scale, n_kv, tk, mxu_dtype):
    _attn_flash(q, k, v, m, o, a, slab, ms, ls, accs,
                scale=scale, n_kv=n_kv, tk=tk, mxu_dtype=mxu_dtype)


def _flash_nomask(q, k, v, o, a, slab, ms, ls, accs, *, scale, n_kv, tk, mxu_dtype):
    _attn_flash(q, k, v, None, o, a, slab, ms, ls, accs,
                scale=scale, n_kv=n_kv, tk=tk, mxu_dtype=mxu_dtype)


# --------------------------------------------------------------------------- #
# Wrapper
# --------------------------------------------------------------------------- #
def scaled_dot_product_attention(query, key, value, key_mask=None, *,
                                 mxu_bf16=False, force_path=None):
    """Matches ScaledDotProductAttention.forward (dropout=None).
    Returns (out, attention_weight).

    mxu_bf16: optionally feed the MXU bf16 operands (f32 accumulation); ~3x MXU
              throughput on v5e for large Dk/Dv at slightly reduced precision.
    force_path: None | "direct" | "flash" (testing / tuning hook).
    """
    orig_ndim = query.ndim
    if orig_ndim == 3:
        q4, k4, v4 = query[:, None], key[:, None], value[:, None]
    else:
        q4, k4, v4 = query, key, value

    B, H, Lq, Dk = q4.shape
    Lk = k4.shape[2]
    Dv = v4.shape[3]
    BH = B * H

    q_flat = q4.reshape(BH, Lq, Dk)
    k_flat = k4.reshape(BH, Lk, Dk)
    v_flat = v4.reshape(BH, Lk, Dv)

    # --- mask normalization -------------------------------------------------
    mask_arr = None
    per_batch = False
    Mq = 1
    if key_mask is not None:
        m = key_mask
        if m.ndim != key.ndim:              # mirrors torch key_mask.unsqueeze(1)
            m = jnp.expand_dims(m, 1)
        if orig_ndim == 3:
            m = jnp.expand_dims(m, 1)       # synthetic head axis
        while m.ndim < 4:
            m = jnp.expand_dims(m, 0)
        Mq = 1 if m.shape[-2] == 1 else Lq
        # thin masks stay int32 (int8 (32,128) packing relayout not worth it);
        # full per-query masks use int8 to cut HBM bytes.
        mask_dtype = jnp.int8 if (Mq == Lq and Lq >= 32) else jnp.int32
        if H > 1 and m.shape[1] == 1:
            # never materialize the H-fold broadcast in HBM
            per_batch = True
            mask_arr = jnp.broadcast_to(m, (B, 1, Mq, Lk)).reshape(B, Mq, Lk)
        else:
            mask_arr = jnp.broadcast_to(m, (B, H, Mq, Lk)).reshape(BH, Mq, Lk)
        mask_arr = mask_arr.astype(mask_dtype)

    scale = 1.0 / math.sqrt(Dk)
    itemsize = jnp.dtype(query.dtype).itemsize
    attn_dtype = query.dtype
    attn_itemsize = jnp.dtype(attn_dtype).itemsize
    mxu_dtype = jnp.bfloat16 if mxu_bf16 else None

    budget, vmem_cap = _vmem_params()
    th_base = H if per_batch else BH

    th_d, tq_d, est_d = _choose_tiles_direct(
        th_base, Lq, Lk, Dk, Dv, itemsize, attn_itemsize, budget)

    if force_path == "flash":
        use_flash = (Lk % 128 == 0)
    elif force_path == "direct":
        use_flash = False
    else:
        # kv-tile only when the direct (full-Lk-resident) path cannot get a
        # healthy tiling inside the VMEM budget.
        use_flash = (Lk % 128 == 0) and (est_d > budget or (Lq >= 128 and tq_d < 128))

    out_shapes = (
        jax.ShapeDtypeStruct((BH, Lq, Dv), query.dtype),
        jax.ShapeDtypeStruct((BH, Lq, Lk), attn_dtype),
    )
    mask_bytes = 0 if mask_arr is None else mask_arr.size * mask_arr.dtype.itemsize
    cost = pl.CostEstimate(
        flops=2 * BH * Lq * Lk * (Dk + Dv),
        transcendentals=(2 if use_flash else 1) * BH * Lq * Lk,
        bytes_accessed=(q_flat.size + k_flat.size + v_flat.size
                        + BH * Lq * Dv) * itemsize
                       + BH * Lq * Lk * attn_itemsize + mask_bytes,
    )

    if use_flash:
        th, tq, tk, _ = _choose_tiles_flash(
            th_base, Lq, Lk, Dk, Dv, itemsize, attn_itemsize, budget)
        n_kv = Lk // tk
        grid = (BH // th, Lq // tq, n_kv)
        heads_per_tile = max(H // th, 1)

        q_spec = pl.BlockSpec((th, tq, Dk), lambda bh, qi, kv: (bh, qi, 0))
        k_spec = pl.BlockSpec((th, tk, Dk), lambda bh, qi, kv: (bh, kv, 0))
        v_spec = pl.BlockSpec((th, tk, Dv), lambda bh, qi, kv: (bh, kv, 0))
        o_spec = pl.BlockSpec((th, tq, Dv), lambda bh, qi, kv: (bh, qi, 0))
        a_spec = pl.BlockSpec((th, tq, Lk), lambda bh, qi, kv: (bh, qi, 0))

        in_specs = [q_spec, k_spec, v_spec]
        args = [q_flat, k_flat, v_flat]
        if mask_arr is not None:
            mq_block = 1 if Mq == 1 else tq
            if per_batch:
                if Mq == 1:
                    m_index = lambda bh, qi, kv: (bh // heads_per_tile, 0, kv)
                else:
                    m_index = lambda bh, qi, kv: (bh // heads_per_tile, qi, kv)
                m_spec = pl.BlockSpec((1, mq_block, tk), m_index)
            else:
                if Mq == 1:
                    m_index = lambda bh, qi, kv: (bh, 0, kv)
                else:
                    m_index = lambda bh, qi, kv: (bh, qi, kv)
                m_spec = pl.BlockSpec((th, mq_block, tk), m_index)
            in_specs.append(m_spec)
            args.append(mask_arr)
            kern = functools.partial(_flash_mask, scale=scale, n_kv=n_kv, tk=tk,
                                     mxu_dtype=mxu_dtype)
        else:
            kern = functools.partial(_flash_nomask, scale=scale, n_kv=n_kv, tk=tk,
                                     mxu_dtype=mxu_dtype)

        scratch = [
            pltpu.VMEM((n_kv, th, tq, tk), jnp.float32),   # raw score slab
            pltpu.VMEM((th, tq, 1), jnp.float32),          # running max
            pltpu.VMEM((th, tq, 1), jnp.float32),          # running denom
            pltpu.VMEM((th, tq, Dv), jnp.float32),         # output accumulator
        ]
        compiler_params = pltpu.CompilerParams(
            # restrict megacore sharding to bh (q residency across kv per (bh,qi))
            dimension_semantics=("parallel",
                                 "parallel" if grid[0] == 1 else "arbitrary",
                                 "arbitrary"),
            vmem_limit_bytes=vmem_cap)

        out, attn = pl.pallas_call(
            kern,
            out_shape=out_shapes,
            grid_spec=pltpu.PrefetchScalarGridSpec(
                num_scalar_prefetch=0,
                grid=grid,
                in_specs=in_specs,
                out_specs=[o_spec, a_spec],
                scratch_shapes=scratch),
            compiler_params=compiler_params,
            cost_estimate=cost,
        )(*args)
    else:
        th, tq = th_d, tq_d
        grid = (BH // th, Lq // tq)         # qi innermost -> K/V blocks stay resident
        heads_per_tile = max(H // th, 1)

        q_spec = pl.BlockSpec((th, tq, Dk), lambda bh, qi: (bh, qi, 0))
        k_spec = pl.BlockSpec((th, Lk, Dk), lambda bh, qi: (bh, 0, 0))
        v_spec = pl.BlockSpec((th, Lk, Dv), lambda bh, qi: (bh, 0, 0))
        o_spec = pl.BlockSpec((th, tq, Dv), lambda bh, qi: (bh, qi, 0))
        a_spec = pl.BlockSpec((th, tq, Lk), lambda bh, qi: (bh, qi, 0))

        in_specs = [q_spec, k_spec, v_spec]
        args = [q_flat, k_flat, v_flat]
        if mask_arr is not None:
            mq_block = 1 if Mq == 1 else tq
            if per_batch:
                if Mq == 1:
                    m_index = lambda bh, qi: (bh // heads_per_tile, 0, 0)
                else:
                    m_index = lambda bh, qi: (bh // heads_per_tile, qi, 0)
                m_spec = pl.BlockSpec((1, mq_block, Lk), m_index)
            else:
                if Mq == 1:
                    m_index = lambda bh, qi: (bh, 0, 0)
                else:
                    m_index = lambda bh, qi: (bh, qi, 0)
                m_spec = pl.BlockSpec((th, mq_block, Lk), m_index)
            in_specs.append(m_spec)
            args.append(mask_arr)
            kern = functools.partial(_direct_mask, scale=scale, mxu_dtype=mxu_dtype)
        else:
            kern = functools.partial(_direct_nomask, scale=scale, mxu_dtype=mxu_dtype)

        compiler_params = pltpu.CompilerParams(
            dimension_semantics=("parallel",
                                 "parallel" if grid[0] == 1 else "arbitrary"),
            vmem_limit_bytes=vmem_cap)

        out, attn = pl.pallas_call(
            kern,
            out_shape=out_shapes,
            grid_spec=pltpu.PrefetchScalarGridSpec(
                num_scalar_prefetch=0,
                grid=grid,
                in_specs=in_specs,
                out_specs=[o_spec, a_spec]),
            compiler_params=compiler_params,
            cost_estimate=cost,
        )(*args)

    out = out.reshape(B, H, Lq, Dv)
    attn = attn.reshape(B, H, Lq, Lk)
    if orig_ndim == 3:
        out = out[:, 0]
        attn = attn[:, 0]
    return out, attn


# --------------------------------------------------------------------------- #
# Reference + tests
# --------------------------------------------------------------------------- #
def _reference(query, key, value, key_mask=None):
    """Pure-JAX reference, mirrors the torch forward."""
    if key_mask is not None and key_mask.ndim != key.ndim:
        key_mask = jnp.expand_dims(key_mask, 1)
    s = jnp.matmul(query, jnp.swapaxes(key, -2, -1)) / math.sqrt(query.shape[-1])
    if key_mask is not None:
        s = jnp.where(key_mask == 0, _NEG_INF, s)
    attn = jax.nn.softmax(s, axis=-1)
    return jnp.matmul(attn, value), attn


def _check(out, attn, out_ref, attn_ref):
    out = jax.block_until_ready(out)
    attn = jax.block_until_ready(attn)
    assert jnp.allclose(out, out_ref, atol=1e-4, rtol=1e-4)
    assert jnp.allclose(attn, attn_ref, atol=1e-5, rtol=1e-4)


if __name__ == "__main__":
    root = jax.random.PRNGKey(0)
    ks = jax.random.split(root, 12)

    # 1) 4-D multi-head config, full per-head/per-query mask -> direct path
    B, H, Lq, Lk, Dk, Dv = 2, 4, 8, 8, 32, 32
    query = jax.random.normal(ks[0], (B, H, Lq, Dk), dtype=jnp.float32)
    key_t = jax.random.normal(ks[1], (B, H, Lk, Dk), dtype=jnp.float32)
    value = jax.random.normal(ks[2], (B, H, Lk, Dv), dtype=jnp.float32)
    mask4 = (jax.random.uniform(ks[3], (B, H, Lq, Lk)) > 0.3).astype(jnp.int32)
    out, attn = scaled_dot_product_attention(query, key_t, value, mask4)
    _check(out, attn, *_reference(query, key_t, value, mask4))

    # 2) 3-D "normal" config, no mask -> direct path
    q3 = jax.random.normal(ks[4], (B, Lq, Dk), dtype=jnp.float32)
    k3 = jax.random.normal(ks[5], (B, Lk, Dk), dtype=jnp.float32)
    v3 = jax.random.normal(ks[6], (B, Lk, Dv), dtype=jnp.float32)
    out3, attn3 = scaled_dot_product_attention(q3, k3, v3)
    _check(out3, attn3, *_reference(q3, k3, v3))

    # 3) 3-D config with a per-key padding mask [B, Lk] -> thin-mask direct path
    pad3 = (jax.random.uniform(ks[7], (B, Lk)) > 0.3).astype(jnp.int32)
    out3m, attn3m = scaled_dot_product_attention(q3, k3, v3, pad3)
    _check(out3m, attn3m, *_reference(q3, k3, v3, pad3))

    # 4) 4-D config, head-size-1 mask [B,1,Lq,Lk] -> per-batch mask path (no H broadcast in HBM)
    maskb = (jax.random.uniform(ks[8], (B, 1, Lq, Lk)) > 0.3).astype(jnp.int32)
    outb, attnb = scaled_dot_product_attention(query, key_t, value, maskb)
    _check(outb, attnb, *_reference(query, key_t, value, maskb))

    # 5) longer sequence, padding mask -> kv-tiled (flash-style) path, per-batch thin mask
    Bf, Hf, Lqf, Lkf, Df = 1, 2, 128, 1024, 32
    qf = jax.random.normal(ks[9], (Bf, Hf, Lqf, Df), dtype=jnp.float32)
    kf = jax.random.normal(ks[10], (Bf, Hf, Lkf, Df), dtype=jnp.float32)
    vf = jax.random.normal(ks[11], (Bf, Hf, Lkf, Df), dtype=jnp.float32)
    maskf = (jax.random.uniform(ks[3], (Bf, 1, 1, Lkf)) > 0.3).astype(jnp.int32)
    outf, attnf = scaled_dot_product_attention(qf, kf, vf, maskf, force_path="flash")
    _check(outf, attnf, *_reference(qf, kf, vf, maskf))

    # 6) same shapes, no mask -> kv-tiled path without mask operand
    outf2, attnf2 = scaled_dot_product_attention(qf, kf, vf, force_path="flash")
    _check(outf2, attnf2, *_reference(qf, kf, vf))

    print("KERNEL_OK")
</pallas_src>

<mosaic_0001>
module attributes {stable_mosaic.version = 11 : i64} {
  func.func @_direct_mask(%arg0: i32, %arg1: i32, %arg2: memref<8x8x32xf32, #tpu.memory_space<vmem>>, %arg3: memref<8x8x32xf32, #tpu.memory_space<vmem>>, %arg4: memref<8x8x32xf32, #tpu.memory_space<vmem>>, %arg5: memref<8x8x8xi32, #tpu.memory_space<vmem>>, %arg6: memref<8x8x32xf32, #tpu.memory_space<vmem>>, %arg7: memref<8x8x8xf32, #tpu.memory_space<vmem>>) attributes {dimension_semantics = [#tpu.dimension_semantics<parallel>, #tpu.dimension_semantics<parallel>], iteration_bounds = array<i64: 1, 1>, scalar_prefetch = 0 : i64, scratch_operands = 0 : i64, tpu.core_type = #tpu.core_type<tc>, window_params = [{transform_indices = @transform_0, window_bounds = array<i64: 8, 8, 32>}, {transform_indices = @transform_1, window_bounds = array<i64: 8, 8, 32>}, {transform_indices = @transform_2, window_bounds = array<i64: 8, 8, 32>}, {transform_indices = @transform_3, window_bounds = array<i64: 8, 8, 8>}, {transform_indices = @transform_4, window_bounds = array<i64: 8, 8, 32>}, {transform_indices = @transform_5, window_bounds = array<i64: 8, 8, 8>}]} {
    %c0 = arith.constant 0 : index
    %c0_0 = arith.constant 0 : index
    %c0_1 = arith.constant 0 : index
    %0 = vector.load %arg2[%c0, %c0_0, %c0_1] : memref<8x8x32xf32, #tpu.memory_space<vmem>>, vector<8x8x32xf32>
    %c0_2 = arith.constant 0 : index
    %c0_3 = arith.constant 0 : index
    %c0_4 = arith.constant 0 : index
    %1 = vector.load %arg3[%c0_2, %c0_3, %c0_4] : memref<8x8x32xf32, #tpu.memory_space<vmem>>, vector<8x8x32xf32>
    %c0_5 = arith.constant 0 : index
    %c0_6 = arith.constant 0 : index
    %c0_7 = arith.constant 0 : index
    %2 = vector.load %arg4[%c0_5, %c0_6, %c0_7] : memref<8x8x32xf32, #tpu.memory_space<vmem>>, vector<8x8x32xf32>
    "tpu.trace_start"() <{level = 10 : i32, message = "bqd,bkd->bqk"}> : () -> ()
    %cst = arith.constant dense<0.000000e+00> : vector<8x8x8xf32>
    %3 = tpu.matmul %0, %1, %cst {dimension_numbers = #tpu.dot_dimension_numbers<[2], [2], [1], [1], [0, 0, 0, 1, 1, 1], [0], [0]>} : vector<8x8x32xf32>, vector<8x8x32xf32>, vector<8x8x8xf32> -> vector<8x8x8xf32>
    "tpu.trace_stop"() : () -> ()
    %cst_8 = arith.constant 0.176776692 : f32
    %4 = vector.broadcast %cst_8 : f32 to vector<8x8x8xf32>
    %5 = arith.mulf %3, %4 : vector<8x8x8xf32>
    %c0_9 = arith.constant 0 : index
    %c0_10 = arith.constant 0 : index
    %c0_11 = arith.constant 0 : index
    %6 = vector.load %arg5[%c0_9, %c0_10, %c0_11] : memref<8x8x8xi32, #tpu.memory_space<vmem>>, vector<8x8x8xi32>
    %c0_i32 = arith.constant 0 : i32
    %7 = vector.broadcast %c0_i32 : i32 to vector<8x8x8xi32>
    %8 = arith.cmpi eq, %6, %7 : vector<8x8x8xi32>
    %cst_12 = arith.constant -1.000000e+30 : f32
    %9 = vector.broadcast %cst_12 : f32 to vector<8x8x8xf32>
    %10 = arith.select %8, %9, %5 : vector<8x8x8xi1>, vector<8x8x8xf32>
    %cst_13 = arith.constant dense<0xFF800000> : vector<8x8xf32>
    %11 = vector.multi_reduction <maximumf>, %10, %cst_13 [2] : vector<8x8x8xf32> to vector<8x8xf32>
    %12 = vector.shape_cast %11 : vector<8x8xf32> to vector<8x8x1xf32>
    %13 = vector.broadcast %12 : vector<8x8x1xf32> to vector<8x8x8xf32>
    %14 = arith.subf %10, %13 : vector<8x8x8xf32>
    %15 = math.exp %14 : vector<8x8x8xf32>
    %cst_14 = arith.constant dense<0.000000e+00> : vector<8x8xf32>
    %16 = vector.multi_reduction <add>, %15, %cst_14 [2] : vector<8x8x8xf32> to vector<8x8xf32>
    %17 = vector.shape_cast %16 : vector<8x8xf32> to vector<8x8x1xf32>
    %18 = tpu.reciprocal %17 {approx = true} : vector<8x8x1xf32> -> vector<8x8x1xf32>
    %19 = arith.mulf %17, %18 : vector<8x8x1xf32>
    %cst_15 = arith.constant 2.000000e+00 : f32
    %20 = vector.broadcast %cst_15 : f32 to vector<8x8x1xf32>
    %21 = arith.subf %20, %19 : vector<8x8x1xf32>
    %22 = arith.mulf %18, %21 : vector<8x8x1xf32>
    %23 = vector.broadcast %22 : vector<8x8x1xf32> to vector<8x8x8xf32>
    %24 = arith.mulf %15, %23 : vector<8x8x8xf32>
    %c0_16 = arith.constant 0 : index
    %c0_17 = arith.constant 0 : index
    %c0_18 = arith.constant 0 : index
    %25 = vector.load %arg7[%c0_16, %c0_17, %c0_18] : memref<8x8x8xf32, #tpu.memory_space<vmem>>, vector<8x8x8xf32>
    tpu.vector_store %arg7[%c0_16, %c0_17, %c0_18], %24 {strides = array<i32>} : memref<8x8x8xf32, #tpu.memory_space<vmem>>, vector<8x8x8xf32>,
    "tpu.trace_start"() <{level = 10 : i32, message = "bqk,bkd->bqd"}> : () -> ()
    %cst_19 = arith.constant dense<0.000000e+00> : vector<8x8x32xf32>
    %26 = tpu.matmul %24, %2, %cst_19 {dimension_numbers = #tpu.dot_dimension_numbers<[2], [1], [1], [2], [0, 0, 0, 1, 1, 2], [0], [0]>} : vector<8x8x8xf32>, vector<8x8x32xf32>, vector<8x8x32xf32> -> vector<8x8x32xf32>
    "tpu.trace_stop"() : () -> ()
    %c0_20 = arith.constant 0 : index
    %c0_21 = arith.constant 0 : index
    %c0_22 = arith.constant 0 : index
    %27 = vector.load %arg6[%c0_20, %c0_21, %c0_22] : memref<8x8x32xf32, #tpu.memory_space<vmem>>, vector<8x8x32xf32>
    tpu.vector_store %arg6[%c0_20, %c0_21, %c0_22], %26 {strides = array<i32>} : memref<8x8x32xf32, #tpu.memory_space<vmem>>, vector<8x8x32xf32>,
    return
  }
  func.func @transform_0(%arg0: i32, %arg1: i32) -> (i32, i32, i32) {
    %c0_i32 = arith.constant 0 : i32
    %c0_i32_0 = arith.constant 0 : i32
    return %arg0, %arg1, %c0_i32 : i32, i32, i32
  }
  func.func @transform_1(%arg0: i32, %arg1: i32) -> (i32, i32, i32) {
    %c0_i32 = arith.constant 0 : i32
    %c0_i32_0 = arith.constant 0 : i32
    %c0_i32_1 = arith.constant 0 : i32
    return %arg0, %c0_i32, %c0_i32_0 : i32, i32, i32
  }
  func.func @transform_2(%arg0: i32, %arg1: i32) -> (i32, i32, i32) {
    %c0_i32 = arith.constant 0 : i32
    %c0_i32_0 = arith.constant 0 : i32
    %c0_i32_1 = arith.constant 0 : i32
    return %arg0, %c0_i32, %c0_i32_0 : i32, i32, i32
  }
  func.func @transform_3(%arg0: i32, %arg1: i32) -> (i32, i32, i32) {
    %c0_i32 = arith.constant 0 : i32
    %c0_i32_0 = arith.constant 0 : i32
    return %arg0, %arg1, %c0_i32 : i32, i32, i32
  }
  func.func @transform_4(%arg0: i32, %arg1: i32) -> (i32, i32, i32) {
    %c0_i32 = arith.constant 0 : i32
    %c0_i32_0 = arith.constant 0 : i32
    return %arg0, %arg1, %c0_i32 : i32, i32, i32
  }
  func.func @transform_5(%arg0: i32, %arg1: i32) -> (i32, i32, i32) {
    %c0_i32 = arith.constant 0 : i32
    %c0_i32_0 = arith.constant 0 : i32
    return %arg0, %arg1, %c0_i32 : i32, i32, i32
  }
}

</mosaic_0001>

<llo_original>
// kernel: tpu_custom_call.1
$region0: #{tpu_custom_call.1}
  #allocation0 [shape = 'u32[]', space=smem, size = 0x4, offset = 0x4, fixed_abs, tag = 'smem constant byte address 0x4 - core index']
  #allocation1 [shape = 'u32[72,128]{1,0:T(1,128)}', space=vmem, size = 0x9000, scoped, tag = 'internal scratch']
  %s0 = inlined_call_operand.hbm [shape: f32[8,8,32], index: 0, kind: input, shape index: {}]
  %s1 = inlined_call_operand.hbm [shape: f32[8,8,32], index: 1, kind: input, shape index: {}]
  %s2 = inlined_call_operand.hbm [shape: f32[8,8,32], index: 2, kind: input, shape index: {}]
  %s3 = inlined_call_operand.hbm [shape: s32[8,8,8], index: 3, kind: input, shape index: {}]
  %s4 = inlined_call_operand.hbm [shape: f32[8,8,32], index: 4, kind: output, shape index: {0}]
  %s5 = inlined_call_operand.hbm [shape: f32[8,8,8], index: 5, kind: output, shape index: {1}]
  %6 = xla_tuple %s4, %s5
  %s7 = sld [smem:[#allocation0]]
  $region50: #{tpu_custom_call.1} parent=0
    _
  %s9 = ssub.s32 1, %s7
  %s10 = scalar_select 0, %s9, %s7
  $region1: #{tpu_custom_call.1} parent=0
    #allocation2 [shape = 'u8[32768]{0}', space=vmem, size = 0x8000, scoped, tag = 'input window, operand 0, single buffered']
    #allocation3 [shape = 's32[1]{0}', space=sflag, size = 0x4, scoped, tag = 'scoped memory for tpu_custom_call.1']
    #allocation4 [shape = 's32[1]{0}', space=sflag, size = 0x4, scoped, tag = 'scoped memory for tpu_custom_call.1']
    #allocation5 [shape = 'u8[32768]{0}', space=vmem, size = 0x8000, scoped, tag = 'input window, operand 1, single buffered']
    #allocation6 [shape = 's32[1]{0}', space=sflag, size = 0x4, scoped, tag = 'scoped memory for tpu_custom_call.1']
    #allocation7 [shape = 'u8[32768]{0}', space=vmem, size = 0x8000, scoped, tag = 'input window, operand 2, single buffered']
    #allocation8 [shape = 'u8[32768]{0}', space=vmem, size = 0x8000, scoped, tag = 'input window, operand 3, single buffered']
    #allocation9 [shape = 's32[1]{0}', space=sflag, size = 0x4, scoped, tag = 'scoped memory for tpu_custom_call.1']
    #allocation10 [shape = 'u8[32768]{0}', space=vmem, size = 0x8000, scoped, tag = 'output window, operand 0, single buffered']
    #allocation11 [shape = 'u8[32768]{0}', space=vmem, size = 0x8000, scoped, tag = 'output window, operand 1, single buffered']
    #allocation12 [shape = 's32[1]{0}', space=sflag, size = 0x4, scoped, tag = 'scoped memory for tpu_custom_call.1']
    %11 = vsyncpa [#allocation3], 0
    %12 = vsyncpa [#allocation6], 0
    %13 = vsyncpa [#allocation9], 0
    %14 = vsyncpa [#allocation4], 0
    %15 = vsyncpa [#allocation12], 0
    // Predicated region
    $region2: #{tpu_custom_call.1} parent=1 // pred_check
      _
    $region3: #{tpu_custom_call.1} parent=1 // pred_check_branch
      %17 = sbr.rel (0) target = $region5
    $region4: #{tpu_custom_call.1} parent=1 // pred_region
      %19 = vsyncadd [#allocation3], 0
      %s20 = sshll.u32 %s0, 4
      %s21 = int_to_ptr.hbm [resolvable:$true] %s20
      %s22 = sshll.u32 [#allocation2], 4
      %s23 = int_to_ptr.vmem [resolvable:$true] %s22
      %28 = dma.hbm_to_vmem [thread:$0]  %s21, 1024, %s23, [#allocation3], 128, 128, 8
    $region5: #{tpu_custom_call.1} parent=1 // pred_fallthru
      _
    // Predicated region
    $region6: #{tpu_custom_call.1} parent=1 // pred_check
      _
    $region7: #{tpu_custom_call.1} parent=1 // pred_check_branch
      %30 = sbr.rel (0) target = $region9
    $region8: #{tpu_custom_call.1} parent=1 // pred_region
      %32 = vsyncadd [#allocation6], 0
      %s33 = sshll.u32 %s1, 4
      %s34 = int_to_ptr.hbm [resolvable:$true] %s33
      %s35 = sshll.u32 [#allocation5], 4
      %s36 = int_to_ptr.vmem [resolvable:$true] %s35
      %41 = dma.hbm_to_vmem [thread:$0]  %s34, 1024, %s36, [#allocation6], 128, 128, 8
    $region9: #{tpu_custom_call.1} parent=1 // pred_fallthru
      _
    // Predicated region
    $region10: #{tpu_custom_call.1} parent=1 // pred_check
      _
    $region11: #{tpu_custom_call.1} parent=1 // pred_check_branch
      %43 = sbr.rel (0) target = $region13
    $region12: #{tpu_custom_call.1} parent=1 // pred_region
      %45 = vsyncadd [#allocation6], 0
      %s46 = sshll.u32 %s2, 4
      %s47 = int_to_ptr.hbm [resolvable:$true] %s46
      %s48 = sshll.u32 [#allocation7], 4
      %s49 = int_to_ptr.vmem [resolvable:$true] %s48
      %54 = dma.hbm_to_vmem [thread:$0]  %s47, 1024, %s49, [#allocation6], 128, 128, 8
    $region13: #{tpu_custom_call.1} parent=1 // pred_fallthru
      _
    // Predicated region
    $region14: #{tpu_custom_call.1} parent=1 // pred_check
      _
    $region15: #{tpu_custom_call.1} parent=1 // pred_check_branch
      %56 = sbr.rel (0) target = $region17
    $region16: #{tpu_custom_call.1} parent=1 // pred_region
      %58 = vsyncadd [#allocation9], 0
      %s59 = sshll.u32 %s3, 4
      %s60 = int_to_ptr.hbm [resolvable:$true] %s59
      %s61 = sshll.u32 [#allocation8], 4
      %s62 = int_to_ptr.vmem [resolvable:$true] %s61
      %67 = dma.hbm_to_vmem [thread:$0]  %s60, 1024, %s62, [#allocation9], 128, 128, 8
    $region17: #{tpu_custom_call.1} parent=1 // pred_fallthru
      _
    // Predicated region
    $region18: #{tpu_custom_call.1} parent=1 // pred_check
      _
    $region19: #{tpu_custom_call.1} parent=1 // pred_check_branch
      %69 = sbr.rel (0) target = $region21
    $region20: #{tpu_custom_call.1} parent=1 // pred_region
      %71 = dma.done [#allocation3], 1024
    $region21: #{tpu_custom_call.1} parent=1 // pred_fallthru
      _
    // Predicated region
    $region22: #{tpu_custom_call.1} parent=1 // pred_check
      _
    $region23: #{tpu_custom_call.1} parent=1 // pred_check_branch
      %73 = sbr.rel (0) target = $region25
    $region24: #{tpu_custom_call.1} parent=1 // pred_region
      %75 = dma.done [#allocation6], 1024
    $region25: #{tpu_custom_call.1} parent=1 // pred_fallthru
      _
    // Predicated region
    $region26: #{tpu_custom_call.1} parent=1 // pred_check
      _
    $region27: #{tpu_custom_call.1} parent=1 // pred_check_branch
      %77 = sbr.rel (0) target = $region29
    $region28: #{tpu_custom_call.1} parent=1 // pred_region
      %79 = dma.done [#allocation6], 1024
    $region29: #{tpu_custom_call.1} parent=1 // pred_fallthru
      _
    // Predicated region
    $region30: #{tpu_custom_call.1} parent=1 // pred_check
      _
    $region31: #{tpu_custom_call.1} parent=1 // pred_check_branch
      %81 = sbr.rel (0) target = $region33
    $region32: #{tpu_custom_call.1} parent=1 // pred_region
      %83 = dma.done [#allocation9], 1024
    $region33: #{tpu_custom_call.1} parent=1 // pred_fallthru
      _
    %v84 = vld [vmem:[#allocation2] sm:$0xff]
    %v85 = vld [vmem:[#allocation2 + $0x8] sm:$0xff]
    %v86 = vld [vmem:[#allocation2 + $0x10] sm:$0xff]
    %v87 = vld [vmem:[#allocation2 + $0x18] sm:$0xff]
    %v88 = vld [vmem:[#allocation2 + $0x20] sm:$0xff]
    %v89 = vld [vmem:[#allocation2 + $0x28] sm:$0xff]
    %v90 = vld [vmem:[#allocation2 + $0x30] sm:$0xff]
    %v91 = vld [vmem:[#allocation2 + $0x38] sm:$0xff]
    %v92 = vld [vmem:[#allocation5] sm:$0xff]
    %v93 = vld [vmem:[#allocation5 + $0x8] sm:$0xff]
    %v94 = vld [vmem:[#allocation5 + $0x10] sm:$0xff]
    %v95 = vld [vmem:[#allocation5 + $0x18] sm:$0xff]
    %v96 = vld [vmem:[#allocation5 + $0x20] sm:$0xff]
    %v97 = vld [vmem:[#allocation5 + $0x28] sm:$0xff]
    %v98 = vld [vmem:[#allocation5 + $0x30] sm:$0xff]
    %v99 = vld [vmem:[#allocation5 + $0x38] sm:$0xff]
    %v100 = vld [vmem:[#allocation7] sm:$0xff]
    %v101 = vld [vmem:[#allocation7 + $0x8] sm:$0xff]
    %v102 = vld [vmem:[#allocation7 + $0x10] sm:$0xff]
    %v103 = vld [vmem:[#allocation7 + $0x18] sm:$0xff]
    %v104 = vld [vmem:[#allocation7 + $0x20] sm:$0xff]
    %v105 = vld [vmem:[#allocation7 + $0x28] sm:$0xff]
    %v106 = vld [vmem:[#allocation7 + $0x30] sm:$0xff]
    %v107 = vld [vmem:[#allocation7 + $0x38] sm:$0xff]
    %vm108 = vcmask 261120
    %v110 = vsel %vm108, %v84, 0
    %v113 = vsel %vm108, %v92, 0
    %115 = vmatpush.xpose.msra.mxu0 0.0
    %116 = vmatpush.xpose.msra.mxu0 0.0
    %117 = vmatpush.xpose.msra.mxu0 0.0
    %118 = vmatpush.xpose.msra.mxu0 0.0
    %119 = vmatpush.xpose.msra.mxu0 0.0
    %120 = vmatpush.xpose.msra.mxu0 0.0
    %121 = vmatpush.xpose.msra.mxu0 0.0
    %122 = vmatpush.xpose.msra.mxu0 0.0
    %123 = vmatpush.xpose.msra.mxu0 0.0
    %124 = vmatpush.xpose.msra.mxu0 0.0
    %125 = vmatpush.xpose.msra.mxu0 0.0
    %126 = vmatpush.xpose.msra.mxu0 0.0
    %127 = vmatpush.xpose.msra.mxu0 0.0
    %128 = vmatpush.xpose.msra.mxu0 0.0
    %129 = vmatpush.xpose.msra.mxu0 0.0
    %130 = vmatpush.xpose.msra.mxu0 %v113
    %131 = vmatmul.f32.gmra.mxu0 %v110
    %v132 = vpop.f32.mrf.mxu0
    %v133 = vadd.f32 0.0, %v132
    %134 = vdwg.mxu0
    %v136 = vsel %vm108, %v85, 0
    %v139 = vsel %vm108, %v93, 0
    %141 = vmatpush.xpose.msra.mxu0 0.0
    %142 = vmatpush.xpose.msra.mxu0 0.0
    %143 = vmatpush.xpose.msra.mxu0 0.0
    %144 = vmatpush.xpose.msra.mxu0 0.0
    %145 = vmatpush.xpose.msra.mxu0 0.0
    %146 = vmatpush.xpose.msra.mxu0 0.0
    %147 = vmatpush.xpose.msra.mxu0 0.0
    %148 = vmatpush.xpose.msra.mxu0 0.0
    %149 = vmatpush.xpose.msra.mxu0 0.0
    %150 = vmatpush.xpose.msra.mxu0 0.0
    %151 = vmatpush.xpose.msra.mxu0 0.0
    %152 = vmatpush.xpose.msra.mxu0 0.0
    %153 = vmatpush.xpose.msra.mxu0 0.0
    %154 = vmatpush.xpose.msra.mxu0 0.0
    %155 = vmatpush.xpose.msra.mxu0 0.0
    %156 = vmatpush.xpose.msra.mxu0 %v139
    %157 = vmatmul.f32.gmra.mxu0 %v136
    %v158 = vpop.f32.mrf.mxu0
    %v159 = vadd.f32 0.0, %v158
    %160 = vdwg.mxu0
    %v162 = vsel %vm108, %v86, 0
    %v165 = vsel %vm108, %v94, 0
    %167 = vmatpush.xpose.msra.mxu0 0.0
    %168 = vmatpush.xpose.msra.mxu0 0.0
    %169 = vmatpush.xpose.msra.mxu0 0.0
    %170 = vmatpush.xpose.msra.mxu0 0.0
    %171 = vmatpush.xpose.msra.mxu0 0.0
    %172 = vmatpush.xpose.msra.mxu0 0.0
    %173 = vmatpush.xpose.msra.mxu0 0.0
    %174 = vmatpush.xpose.msra.mxu0 0.0
    %175 = vmatpush.xpose.msra.mxu0 0.0
    %176 = vmatpush.xpose.msra.mxu0 0.0
    %177 = vmatpush.xpose.msra.mxu0 0.0
    %178 = vmatpush.xpose.msra.mxu0 0.0
    %179 = vmatpush.xpose.msra.mxu0 0.0
    %180 = vmatpush.xpose.msra.mxu0 0.0
    %181 = vmatpush.xpose.msra.mxu0 0.0
    %182 = vmatpush.xpose.msra.mxu0 %v165
    %183 = vmatmul.f32.gmra.mxu0 %v162
    %v184 = vpop.f32.mrf.mxu0
    %v185 = vadd.f32 0.0, %v184
    %186 = vdwg.mxu0
    %v188 = vsel %vm108, %v87, 0
    %v191 = vsel %vm108, %v95, 0
    %193 = vmatpush.xpose.msra.mxu0 0.0
    %194 = vmatpush.xpose.msra.mxu0 0.0
    %195 = vmatpush.xpose.msra.mxu0 0.0
    %196 = vmatpush.xpose.msra.mxu0 0.0
    %197 = vmatpush.xpose.msra.mxu0 0.0
    %198 = vmatpush.xpose.msra.mxu0 0.0
    %199 = vmatpush.xpose.msra.mxu0 0.0
    %200 = vmatpush.xpose.msra.mxu0 0.0
    %201 = vmatpush.xpose.msra.mxu0 0.0
    %202 = vmatpush.xpose.msra.mxu0 0.0
    %203 = vmatpush.xpose.msra.mxu0 0.0
    %204 = vmatpush.xpose.msra.mxu0 0.0
    %205 = vmatpush.xpose.msra.mxu0 0.0
    %206 = vmatpush.xpose.msra.mxu0 0.0
    %207 = vmatpush.xpose.msra.mxu0 0.0
    %208 = vmatpush.xpose.msra.mxu0 %v191
    %209 = vmatmul.f32.gmra.mxu0 %v188
    %v210 = vpop.f32.mrf.mxu0
    %v211 = vadd.f32 0.0, %v210
    %212 = vdwg.mxu0
    %v214 = vsel %vm108, %v88, 0
    %v217 = vsel %vm108, %v96, 0
    %219 = vmatpush.xpose.msra.mxu0 0.0
    %220 = vmatpush.xpose.msra.mxu0 0.0
    %221 = vmatpush.xpose.msra.mxu0 0.0
    %222 = vmatpush.xpose.msra.mxu0 0.0
    %223 = vmatpush.xpose.msra.mxu0 0.0
    %224 = vmatpush.xpose.msra.mxu0 0.0
    %225 = vmatpush.xpose.msra.mxu0 0.0
    %226 = vmatpush.xpose.msra.mxu0 0.0
    %227 = vmatpush.xpose.msra.mxu0 0.0
    %228 = vmatpush.xpose.msra.mxu0 0.0
    %229 = vmatpush.xpose.msra.mxu0 0.0
    %230 = vmatpush.xpose.msra.mxu0 0.0
    %231 = vmatpush.xpose.msra.mxu0 0.0
    %232 = vmatpush.xpose.msra.mxu0 0.0
    %233 = vmatpush.xpose.msra.mxu0 0.0
    %234 = vmatpush.xpose.msra.mxu0 %v217
    %235 = vmatmul.f32.gmra.mxu0 %v214
    %v236 = vpop.f32.mrf.mxu0
    %v237 = vadd.f32 0.0, %v236
    %238 = vdwg.mxu0
    %v240 = vsel %vm108, %v89, 0
    %v243 = vsel %vm108, %v97, 0
    %245 = vmatpush.xpose.msra.mxu0 0.0
    %246 = vmatpush.xpose.msra.mxu0 0.0
    %247 = vmatpush.xpose.msra.mxu0 0.0
    %248 = vmatpush.xpose.msra.mxu0 0.0
    %249 = vmatpush.xpose.msra.mxu0 0.0
    %250 = vmatpush.xpose.msra.mxu0 0.0
    %251 = vmatpush.xpose.msra.mxu0 0.0
    %252 = vmatpush.xpose.msra.mxu0 0.0
    %253 = vmatpush.xpose.msra.mxu0 0.0
    %254 = vmatpush.xpose.msra.mxu0 0.0
    %255 = vmatpush.xpose.msra.mxu0 0.0
    %256 = vmatpush.xpose.msra.mxu0 0.0
    %257 = vmatpush.xpose.msra.mxu0 0.0
    %258 = vmatpush.xpose.msra.mxu0 0.0
    %259 = vmatpush.xpose.msra.mxu0 0.0
    %260 = vmatpush.xpose.msra.mxu0 %v243
    %261 = vmatmul.f32.gmra.mxu0 %v240
    %v262 = vpop.f32.mrf.mxu0
    %v263 = vadd.f32 0.0, %v262
    %264 = vdwg.mxu0
    %v266 = vsel %vm108, %v90, 0
    %v269 = vsel %vm108, %v98, 0
    %271 = vmatpush.xpose.msra.mxu0 0.0
    %272 = vmatpush.xpose.msra.mxu0 0.0
    %273 = vmatpush.xpose.msra.mxu0 0.0
    %274 = vmatpush.xpose.msra.mxu0 0.0
    %275 = vmatpush.xpose.msra.mxu0 0.0
    %276 = vmatpush.xpose.msra.mxu0 0.0
    %277 = vmatpush.xpose.msra.mxu0 0.0
    %278 = vmatpush.xpose.msra.mxu0 0.0
    %279 = vmatpush.xpose.msra.mxu0 0.0
    %280 = vmatpush.xpose.msra.mxu0 0.0
    %281 = vmatpush.xpose.msra.mxu0 0.0
    %282 = vmatpush.xpose.msra.mxu0 0.0
    %283 = vmatpush.xpose.msra.mxu0 0.0
    %284 = vmatpush.xpose.msra.mxu0 0.0
    %285 = vmatpush.xpose.msra.mxu0 0.0
    %286 = vmatpush.xpose.msra.mxu0 %v269
    %287 = vmatmul.f32.gmra.mxu0 %v266
    %v288 = vpop.f32.mrf.mxu0
    %v289 = vadd.f32 0.0, %v288
    %290 = vdwg.mxu0
    %v292 = vsel %vm108, %v91, 0
    %v295 = vsel %vm108, %v99, 0
    %297 = vmatpush.xpose.msra.mxu0 0.0
    %298 = vmatpush.xpose.msra.mxu0 0.0
    %299 = vmatpush.xpose.msra.mxu0 0.0
    %300 = vmatpush.xpose.msra.mxu0 0.0
    %301 = vmatpush.xpose.msra.mxu0 0.0
    %302 = vmatpush.xpose.msra.mxu0 0.0
    %303 = vmatpush.xpose.msra.mxu0 0.0
    %304 = vmatpush.xpose.msra.mxu0 0.0
    %305 = vmatpush.xpose.msra.mxu0 0.0
    %306 = vmatpush.xpose.msra.mxu0 0.0
    %307 = vmatpush.xpose.msra.mxu0 0.0
    %308 = vmatpush.xpose.msra.mxu0 0.0
    %309 = vmatpush.xpose.msra.mxu0 0.0
    %310 = vmatpush.xpose.msra.mxu0 0.0
    %311 = vmatpush.xpose.msra.mxu0 0.0
    %312 = vmatpush.xpose.msra.mxu0 %v295
    %313 = vmatmul.f32.gmra.mxu0 %v292
    %v314 = vpop.f32.mrf.mxu0
    %v315 = vadd.f32 0.0, %v314
    %316 = vdwg.mxu0
    %v317 = vmul.f32 %v133, 0.17677669
    %v318 = vmul.f32 %v159, 0.17677669
    %v319 = vmul.f32 %v185, 0.17677669
    %v320 = vmul.f32 %v211, 0.17677669
    %v321 = vmul.f32 %v237, 0.17677669
    %v322 = vmul.f32 %v263, 0.17677669
    %v323 = vmul.f32 %v289, 0.17677669
    %v324 = vmul.f32 %v315, 0.17677669
    %v325 = vld [vmem:[#allocation8] sm:$0xff]
    %v326 = vld [vmem:[#allocation8 + $0x8] sm:$0xff]
    %v327 = vld [vmem:[#allocation8 + $0x10] sm:$0xff]
    %v328 = vld [vmem:[#allocation8 + $0x18] sm:$0xff]
    %v329 = vld [vmem:[#allocation8 + $0x20] sm:$0xff]
    %v330 = vld [vmem:[#allocation8 + $0x28] sm:$0xff]
    %v331 = vld [vmem:[#allocation8 + $0x30] sm:$0xff]
    %v332 = vld [vmem:[#allocation8 + $0x38] sm:$0xff]
    %vm333 = vcmp.eq.s32.totalorder %v325, 0
    %vm334 = vcmp.eq.s32.totalorder %v326, 0
    %vm335 = vcmp.eq.s32.totalorder %v327, 0
    %vm336 = vcmp.eq.s32.totalorder %v328, 0
    %vm337 = vcmp.eq.s32.totalorder %v329, 0
    %vm338 = vcmp.eq.s32.totalorder %v330, 0
    %vm339 = vcmp.eq.s32.totalorder %v331, 0
    %vm340 = vcmp.eq.s32.totalorder %v332, 0
    %v341 = vsel %vm333, -1e+30, %v317
    %v342 = vsel %vm334, -1e+30, %v318
    %v343 = vsel %vm335, -1e+30, %v319
    %v344 = vsel %vm336, -1e+30, %v320
    %v345 = vsel %vm337, -1e+30, %v321
    %v346 = vsel %vm338, -1e+30, %v322
    %v347 = vsel %vm339, -1e+30, %v323
    %v348 = vsel %vm340, -1e+30, %v324
    %vm349 = vcmask 64512
    %v350 = vsel %vm349, %v341, -inf
    %351 = vmax.xlane.f32.xlu0 %v350
    %v352 = vpop.xlane.xlu0 %351
    %v353 = vsel %vm349, %v342, -inf
    %354 = vmax.xlane.f32.xlu0 %v353
    %v355 = vpop.xlane.xlu0 %354
    %v356 = vsel %vm349, %v343, -inf
    %357 = vmax.xlane.f32.xlu0 %v356
    %v358 = vpop.xlane.xlu0 %357
    %v359 = vsel %vm349, %v344, -inf
    %360 = vmax.xlane.f32.xlu0 %v359
    %v361 = vpop.xlane.xlu0 %360
    %v362 = vsel %vm349, %v345, -inf
    %363 = vmax.xlane.f32.xlu0 %v362
    %v364 = vpop.xlane.xlu0 %363
    %v365 = vsel %vm349, %v346, -inf
    %366 = vmax.xlane.f32.xlu0 %v365
    %v367 = vpop.xlane.xlu0 %366
    %v368 = vsel %vm349, %v347, -inf
    %369 = vmax.xlane.f32.xlu0 %v368
    %v370 = vpop.xlane.xlu0 %369
    %v371 = vsel %vm349, %v348, -inf
    %372 = vmax.xlane.f32.xlu0 %v371
    %v373 = vpop.xlane.xlu0 %372
    %v374 = vsub.f32 %v341, %v352
    %v375 = vsub.f32 %v342, %v355
    %v376 = vsub.f32 %v343, %v358
    %v377 = vsub.f32 %v344, %v361
    %v378 = vsub.f32 %v345, %v364
    %v379 = vsub.f32 %v346, %v367
    %v380 = vsub.f32 %v347, %v370
    %v381 = vsub.f32 %v348, %v373
    %v382 = vmul.f32 %v374, 1.442695
    %v383 = vpow.pop %v382
    %v384 = vmul.f32 %v375, 1.442695
    %v385 = vpow.pop %v384
    %v386 = vmul.f32 %v376, 1.442695
    %v387 = vpow.pop %v386
    %v388 = vmul.f32 %v377, 1.442695
    %v389 = vpow.pop %v388
    %v390 = vmul.f32 %v378, 1.442695
    %v391 = vpow.pop %v390
    %v392 = vmul.f32 %v379, 1.442695
    %v393 = vpow.pop %v392
    %v394 = vmul.f32 %v380, 1.442695
    %v395 = vpow.pop %v394
    %v396 = vmul.f32 %v381, 1.442695
    %v397 = vpow.pop %v396
    %v398 = vsel %vm349, %v383, 0.0
    %399 = vadd.xlane.f32.xlu0 %v398
    %v400 = vpop.xlane.xlu0 %399
    %v401 = vsel %vm349, %v385, 0.0
    %402 = vadd.xlane.f32.xlu0 %v401
    %v403 = vpop.xlane.xlu0 %402
    %v404 = vsel %vm349, %v387, 0.0
    %405 = vadd.xlane.f32.xlu0 %v404
    %v406 = vpop.xlane.xlu0 %405
    %v407 = vsel %vm349, %v389, 0.0
    %408 = vadd.xlane.f32.xlu0 %v407
    %v409 = vpop.xlane.xlu0 %408
    %v410 = vsel %vm349, %v391, 0.0
    %411 = vadd.xlane.f32.xlu0 %v410
    %v412 = vpop.xlane.xlu0 %411
    %v413 = vsel %vm349, %v393, 0.0
    %414 = vadd.xlane.f32.xlu0 %v413
    %v415 = vpop.xlane.xlu0 %414
    %v416 = vsel %vm349, %v395, 0.0
    %417 = vadd.xlane.f32.xlu0 %v416
    %v418 = vpop.xlane.xlu0 %417
    %v419 = vsel %vm349, %v397, 0.0
    %420 = vadd.xlane.f32.xlu0 %v419
    %v421 = vpop.xlane.xlu0 %420
    %v422 = vrcp.pop %v400
    %v423 = vrcp.pop %v403
    %v424 = vrcp.pop %v406
    %v425 = vrcp.pop %v409
    %v426 = vrcp.pop %v412
    %v427 = vrcp.pop %v415
    %v428 = vrcp.pop %v418
    %v429 = vrcp.pop %v421
    %v430 = vmul.f32 %v400, %v422
    %v431 = vmul.f32 %v403, %v423
    %v432 = vmul.f32 %v406, %v424
    %v433 = vmul.f32 %v409, %v425
    %v434 = vmul.f32 %v412, %v426
    %v435 = vmul.f32 %v415, %v427
    %v436 = vmul.f32 %v418, %v428
    %v437 = vmul.f32 %v421, %v429
    %v438 = vsub.f32 2.0, %v430
    %v439 = vsub.f32 2.0, %v431
    %v440 = vsub.f32 2.0, %v432
    %v441 = vsub.f32 2.0, %v433
    %v442 = vsub.f32 2.0, %v434
    %v443 = vsub.f32 2.0, %v435
    %v444 = vsub.f32 2.0, %v436
    %v445 = vsub.f32 2.0, %v437
    %v446 = vmul.f32 %v422, %v438
    %v447 = vmul.f32 %v423, %v439
    %v448 = vmul.f32 %v424, %v440
    %v449 = vmul.f32 %v425, %v441
    %v450 = vmul.f32 %v426, %v442
    %v451 = vmul.f32 %v427, %v443
    %v452 = vmul.f32 %v428, %v444
    %v453 = vmul.f32 %v429, %v445
    %v454 = vmul.f32 %v383, %v446
    %v455 = vmul.f32 %v385, %v447
    %v456 = vmul.f32 %v387, %v448
    %v457 = vmul.f32 %v389, %v449
    %v458 = vmul.f32 %v391, %v450
    %v459 = vmul.f32 %v393, %v451
    %v460 = vmul.f32 %v395, %v452
    %v461 = vmul.f32 %v397, %v453
    %462 = vst.msk [vmem:[#allocation11] sm:$0xff] %vm349, %v454
    %463 = vst.msk [vmem:[#allocation11 + $0x8] sm:$0xff] %vm349, %v455
    %464 = vst.msk [vmem:[#allocation11 + $0x10] sm:$0xff] %vm349, %v456
    %465 = vst.msk [vmem:[#allocation11 + $0x18] sm:$0xff] %vm349, %v457
    %466 = vst.msk [vmem:[#allocation11 + $0x20] sm:$0xff] %vm349, %v458
    %467 = vst.msk [vmem:[#allocation11 + $0x28] sm:$0xff] %vm349, %v459
    %468 = vst.msk [vmem:[#allocation11 + $0x30] sm:$0xff] %vm349, %v460
    %469 = vst.msk [vmem:[#allocation11 + $0x38] sm:$0xff] %vm349, %v461
    %v471 = vsel %vm349, %v454, 0
    %473 = vmatpush.msra.mxu0 0.0
    %474 = vmatpush.msra.mxu0 0.0
    %475 = vmatpush.msra.mxu0 0.0
    %476 = vmatpush.msra.mxu0 0.0
    %477 = vmatpush.msra.mxu0 0.0
    %478 = vmatpush.msra.mxu0 0.0
    %479 = vmatpush.msra.mxu0 0.0
    %480 = vmatpush.msra.mxu0 0.0
    %481 = vmatpush.msra.mxu0 0.0
    %482 = vmatpush.msra.mxu0 0.0
    %483 = vmatpush.msra.mxu0 0.0
    %484 = vmatpush.msra.mxu0 0.0
    %485 = vmatpush.msra.mxu0 0.0
    %486 = vmatpush.msra.mxu0 0.0
    %487 = vmatpush.msra.mxu0 0.0
    %488 = vmatpush.msra.mxu0 %v100
    %489 = vmatmul.f32.gmra.mxu0 %v471
    %v490 = vpop.f32.mrf.mxu0
    %v491 = vadd.f32 0.0, %v490
    %492 = vdwg.mxu0
    %v494 = vsel %vm349, %v455, 0
    %496 = vmatpush.msra.mxu0 0.0
    %497 = vmatpush.msra.mxu0 0.0
    %498 = vmatpush.msra.mxu0 0.0
    %499 = vmatpush.msra.mxu0 0.0
    %500 = vmatpush.msra.mxu0 0.0
    %501 = vmatpush.msra.mxu0 0.0
    %502 = vmatpush.msra.mxu0 0.0
    %503 = vmatpush.msra.mxu0 0.0
    %504 = vmatpush.msra.mxu0 0.0
    %505 = vmatpush.msra.mxu0 0.0
    %506 = vmatpush.msra.mxu0 0.0
    %507 = vmatpush.msra.mxu0 0.0
    %508 = vmatpush.msra.mxu0 0.0
    %509 = vmatpush.msra.mxu0 0.0
    %510 = vmatpush.msra.mxu0 0.0
    %511 = vmatpush.msra.mxu0 %v101
    %512 = vmatmul.f32.gmra.mxu0 %v494
    %v513 = vpop.f32.mrf.mxu0
    %v514 = vadd.f32 0.0, %v513
    %515 = vdwg.mxu0
    %v517 = vsel %vm349, %v456, 0
    %519 = vmatpush.msra.mxu0 0.0
    %520 = vmatpush.msra.mxu0 0.0
    %521 = vmatpush.msra.mxu0 0.0
    %522 = vmatpush.msra.mxu0 0.0
    %523 = vmatpush.msra.mxu0 0.0
    %524 = vmatpush.msra.mxu0 0.0
    %525 = vmatpush.msra.mxu0 0.0
    %526 = vmatpush.msra.mxu0 0.0
    %527 = vmatpush.msra.mxu0 0.0
    %528 = vmatpush.msra.mxu0 0.0
    %529 = vmatpush.msra.mxu0 0.0
    %530 = vmatpush.msra.mxu0 0.0
    %531 = vmatpush.msra.mxu0 0.0
    %532 = vmatpush.msra.mxu0 0.0
    %533 = vmatpush.msra.mxu0 0.0
    %534 = vmatpush.msra.mxu0 %v102
    %535 = vmatmul.f32.gmra.mxu0 %v517
    %v536 = vpop.f32.mrf.mxu0
    %v537 = vadd.f32 0.0, %v536
    %538 = vdwg.mxu0
    %v540 = vsel %vm349, %v457, 0
    %542 = vmatpush.msra.mxu0 0.0
    %543 = vmatpush.msra.mxu0 0.0
    %544 = vmatpush.msra.mxu0 0.0
    %545 = vmatpush.msra.mxu0 0.0
    %546 = vmatpush.msra.mxu0 0.0
    %547 = vmatpush.msra.mxu0 0.0
    %548 = vmatpush.msra.mxu0 0.0
    %549 = vmatpush.msra.mxu0 0.0
    %550 = vmatpush.msra.mxu0 0.0
    %551 = vmatpush.msra.mxu0 0.0
    %552 = vmatpush.msra.mxu0 0.0
    %553 = vmatpush.msra.mxu0 0.0
    %554 = vmatpush.msra.mxu0 0.0
    %555 = vmatpush.msra.mxu0 0.0
    %556 = vmatpush.msra.mxu0 0.0
    %557 = vmatpush.msra.mxu0 %v103
    %558 = vmatmul.f32.gmra.mxu0 %v540
    %v559 = vpop.f32.mrf.mxu0
    %v560 = vadd.f32 0.0, %v559
    %561 = vdwg.mxu0
    %v563 = vsel %vm349, %v458, 0
    %565 = vmatpush.msra.mxu0 0.0
    %566 = vmatpush.msra.mxu0 0.0
    %567 = vmatpush.msra.mxu0 0.0
    %568 = vmatpush.msra.mxu0 0.0
    %569 = vmatpush.msra.mxu0 0.0
    %570 = vmatpush.msra.mxu0 0.0
    %571 = vmatpush.msra.mxu0 0.0
    %572 = vmatpush.msra.mxu0 0.0
    %573 = vmatpush.msra.mxu0 0.0
    %574 = vmatpush.msra.mxu0 0.0
    %575 = vmatpush.msra.mxu0 0.0
    %576 = vmatpush.msra.mxu0 0.0
    %577 = vmatpush.msra.mxu0 0.0
    %578 = vmatpush.msra.mxu0 0.0
    %579 = vmatpush.msra.mxu0 0.0
    %580 = vmatpush.msra.mxu0 %v104
    %581 = vmatmul.f32.gmra.mxu0 %v563
    %v582 = vpop.f32.mrf.mxu0
    %v583 = vadd.f32 0.0, %v582
    %584 = vdwg.mxu0
    %v586 = vsel %vm349, %v459, 0
    %588 = vmatpush.msra.mxu0 0.0
    %589 = vmatpush.msra.mxu0 0.0
    %590 = vmatpush.msra.mxu0 0.0
    %591 = vmatpush.msra.mxu0 0.0
    %592 = vmatpush.msra.mxu0 0.0
    %593 = vmatpush.msra.mxu0 0.0
    %594 = vmatpush.msra.mxu0 0.0
    %595 = vmatpush.msra.mxu0 0.0
    %596 = vmatpush.msra.mxu0 0.0
    %597 = vmatpush.msra.mxu0 0.0
    %598 = vmatpush.msra.mxu0 0.0
    %599 = vmatpush.msra.mxu0 0.0
    %600 = vmatpush.msra.mxu0 0.0
    %601 = vmatpush.msra.mxu0 0.0
    %602 = vmatpush.msra.mxu0 0.0
    %603 = vmatpush.msra.mxu0 %v105
    %604 = vmatmul.f32.gmra.mxu0 %v586
    %v605 = vpop.f32.mrf.mxu0
    %v606 = vadd.f32 0.0, %v605
    %607 = vdwg.mxu0
    %v609 = vsel %vm349, %v460, 0
    %611 = vmatpush.msra.mxu0 0.0
    %612 = vmatpush.msra.mxu0 0.0
    %613 = vmatpush.msra.mxu0 0.0
    %614 = vmatpush.msra.mxu0 0.0
    %615 = vmatpush.msra.mxu0 0.0
    %616 = vmatpush.msra.mxu0 0.0
    %617 = vmatpush.msra.mxu0 0.0
    %618 = vmatpush.msra.mxu0 0.0
    %619 = vmatpush.msra.mxu0 0.0
    %620 = vmatpush.msra.mxu0 0.0
    %621 = vmatpush.msra.mxu0 0.0
    %622 = vmatpush.msra.mxu0 0.0
    %623 = vmatpush.msra.mxu0 0.0
    %624 = vmatpush.msra.mxu0 0.0
    %625 = vmatpush.msra.mxu0 0.0
    %626 = vmatpush.msra.mxu0 %v106
    %627 = vmatmul.f32.gmra.mxu0 %v609
    %v628 = vpop.f32.mrf.mxu0
    %v629 = vadd.f32 0.0, %v628
    %630 = vdwg.mxu0
    %v632 = vsel %vm349, %v461, 0
    %634 = vmatpush.msra.mxu0 0.0
    %635 = vmatpush.msra.mxu0 0.0
    %636 = vmatpush.msra.mxu0 0.0
    %637 = vmatpush.msra.mxu0 0.0
    %638 = vmatpush.msra.mxu0 0.0
    %639 = vmatpush.msra.mxu0 0.0
    %640 = vmatpush.msra.mxu0 0.0
    %641 = vmatpush.msra.mxu0 0.0
    %642 = vmatpush.msra.mxu0 0.0
    %643 = vmatpush.msra.mxu0 0.0
    %644 = vmatpush.msra.mxu0 0.0
    %645 = vmatpush.msra.mxu0 0.0
    %646 = vmatpush.msra.mxu0 0.0
    %647 = vmatpush.msra.mxu0 0.0
    %648 = vmatpush.msra.mxu0 0.0
    %649 = vmatpush.msra.mxu0 %v107
    %650 = vmatmul.f32.gmra.mxu0 %v632
    %v651 = vpop.f32.mrf.mxu0
    %v652 = vadd.f32 0.0, %v651
    %653 = vdwg.mxu0
    %654 = vst.msk [vmem:[#allocation10] sm:$0xff] %vm108, %v491
    %655 = vst.msk [vmem:[#allocation10 + $0x8] sm:$0xff] %vm108, %v514
    %656 = vst.msk [vmem:[#allocation10 + $0x10] sm:$0xff] %vm108, %v537
    %657 = vst.msk [vmem:[#allocation10 + $0x18] sm:$0xff] %vm108, %v560
    %658 = vst.msk [vmem:[#allocation10 + $0x20] sm:$0xff] %vm108, %v583
    %659 = vst.msk [vmem:[#allocation10 + $0x28] sm:$0xff] %vm108, %v606
    %660 = vst.msk [vmem:[#allocation10 + $0x30] sm:$0xff] %vm108, %v629
    %661 = vst.msk [vmem:[#allocation10 + $0x38] sm:$0xff] %vm108, %v652
    // Predicated region
    $region34: #{tpu_custom_call.1} parent=1 // pred_check
      _
    $region35: #{tpu_custom_call.1} parent=1 // pred_check_branch
      %663 = sbr.rel (0) target = $region37
    $region36: #{tpu_custom_call.1} parent=1 // pred_region
      %665 = vsyncadd [#allocation4], 0
      %s666 = sshll.u32 [#allocation10], 4
      %s667 = int_to_ptr.vmem [resolvable:$true] %s666
      %s668 = sshll.u32 %s4, 4
      %s669 = int_to_ptr.hbm [resolvable:$true] %s668
      %674 = dma.vmem_to_hbm [thread:$0]  %s667, 1024, %s669, [#allocation4], 128, 128, 8
    $region37: #{tpu_custom_call.1} parent=1 // pred_fallthru
      _
    // Predicated region
    $region38: #{tpu_custom_call.1} parent=1 // pred_check
      _
    $region39: #{tpu_custom_call.1} parent=1 // pred_check_branch
      %676 = sbr.rel (0) target = $region41
    $region40: #{tpu_custom_call.1} parent=1 // pred_region
      %678 = vsyncadd [#allocation12], 0
      %s679 = sshll.u32 [#allocation11], 4
      %s680 = int_to_ptr.vmem [resolvable:$true] %s679
      %s681 = sshll.u32 %s5, 4
      %s682 = int_to_ptr.hbm [resolvable:$true] %s681
      %687 = dma.vmem_to_hbm [thread:$0]  %s680, 1024, %s682, [#allocation12], 128, 128, 8
    $region41: #{tpu_custom_call.1} parent=1 // pred_fallthru
      _
    // Predicated region
    $region42: #{tpu_custom_call.1} parent=1 // pred_check
      _
    $region43: #{tpu_custom_call.1} parent=1 // pred_check_branch
      %689 = sbr.rel (0) target = $region45
    $region44: #{tpu_custom_call.1} parent=1 // pred_region
      %691 = dma.done [#allocation4], 1024
    $region45: #{tpu_custom_call.1} parent=1 // pred_fallthru
      _
    // Predicated region
    $region46: #{tpu_custom_call.1} parent=1 // pred_check
      _
    $region47: #{tpu_custom_call.1} parent=1 // pred_check_branch
      %693 = sbr.rel (0) target = $region49
    $region48: #{tpu_custom_call.1} parent=1 // pred_region
      %695 = dma.done [#allocation12], 1024
    $region49: #{tpu_custom_call.1} parent=1 // pred_fallthru
      _
    %696 = vsyncpa [#allocation3], 1
    %697 = vsyncpa [#allocation6], 1
    %698 = vsyncpa [#allocation9], 1
    %699 = vsyncpa [#allocation4], 1
    %700 = vsyncpa [#allocation12], 1

</llo_original>
